<compile_context>
chip_gen: v7x
topology: tpu7x:2x2x1
jax: 0.10.0
libtpu: 0.0.40
codegen_flags: <defaults>
</compile_context>

<pallas_src>
import functools

import jax
import jax.numpy as jnp
from jax import lax
from jax.experimental import pallas as pl
from jax.experimental.pallas import tpu as pltpu

LN_EPS = 1e-5        # torch.nn.LayerNorm default
L2_EPS = 1e-12       # F.normalize default
# MXU inputs in bf16 (f32 accumulate).  Set to jnp.float32 for bit-closer-to-torch numerics.
MATMUL_DTYPE = jnp.bfloat16


def _layernorm(x, gamma, beta):
    # Single-pass variance: E[x^2] - E[x]^2  (one element-wise pass, two independent reductions).
    mean = jnp.mean(x, axis=-1, keepdims=True)
    mean_sq = jnp.mean(x * x, axis=-1, keepdims=True)
    var = jnp.maximum(mean_sq - mean * mean, 0.0)
    return (x - mean) * lax.rsqrt(var + LN_EPS) * gamma + beta


def _l2_normalize_rows(w):
    # F.normalize(w, p=2, dim=1) == w / max(||w||, eps) == w * rsqrt(max(sumsq, eps^2)).
    sumsq = jnp.sum(w * w, axis=-1, keepdims=True)
    return w * lax.rsqrt(jnp.maximum(sumsq, L2_EPS * L2_EPS))


def _make_stack_kernel(first_call: bool):
    def kernel(*refs):
        if first_call:
            (x_ref, wh_ref, wr_ref, alpha_ref, decay_ref,
             _g_rec_ref, b_rec_ref, g_act_ref, b_act_ref,
             out_ref, acts_ref, new_wh_ref, new_wr_ref, act_ref) = refs
        else:
            (x_ref, prev_ref, wh_ref, wr_ref, alpha_ref, decay_ref,
             g_rec_ref, b_rec_ref, g_act_ref, b_act_ref,
             out_ref, acts_ref, new_wh_ref, new_wr_ref, act_ref) = refs

        l = pl.program_id(0)

        @pl.when(l == 0)
        def _():
            act_ref[...] = x_ref[...]            # layer 0 stimulus

        stim = act_ref[...]                      # (B, D) f32, carried across layers
        wh = wh_ref[0]                           # (D, D) f32
        wr = wr_ref[0]                           # (D, D) f32
        alpha = alpha_ref[0]                     # (1, D)  column-wise modulation
        keep = 1.0 - decay_ref[0]                # (D, 1)  row decay folded as w * (1 - decay)

        stim_c = stim.astype(MATMUL_DTYPE)
        stim_out = jnp.dot(stim_c, wh.astype(MATMUL_DTYPE),
                           preferred_element_type=jnp.float32)

        if first_call:
            # previous_activation == 0: recurrent matmul is dead work, LayerNorm(0) == bias,
            # and the recurrent Hebbian outer product vanishes.
            rec_norm = b_rec_ref[0]
            new_wr = wr * keep
        else:
            prev = prev_ref[0]                   # (B, D)
            prev_c = prev.astype(MATMUL_DTYPE)
            rec_out = jnp.dot(prev_c, wr.astype(MATMUL_DTYPE),
                              preferred_element_type=jnp.float32)
            rec_norm = _layernorm(rec_out, g_rec_ref[0], b_rec_ref[0])
            rec_upd = lax.dot_general(
                prev_c, (rec_out * alpha).astype(MATMUL_DTYPE),
                dimension_numbers=(((0,), (0,)), ((), ())),
                preferred_element_type=jnp.float32)
            new_wr = wr * keep + rec_upd

        final = _layernorm(jnp.maximum(stim_out + rec_norm, 0.0),
                           g_act_ref[0], b_act_ref[0])

        act_ref[...] = final                     # carry to next layer
        acts_ref[0] = final                      # new previous_activation state (per layer)
        out_ref[...] = final                     # SubNetwork output == last layer's activation

        # Hebbian plasticity (alpha folded into the small (B, D) operand, decay folded above).
        # TODO(synk): at tiny B the K=B contraction leaves the MXU mostly idle; a padded-batch
        #             or VPU outer-product formulation is preferable when B << 128.
        hebb_upd = lax.dot_general(
            stim_c, (stim_out * alpha).astype(MATMUL_DTYPE),
            dimension_numbers=(((0,), (0,)), ((), ())),
            preferred_element_type=jnp.float32)
        new_wh_ref[0] = _l2_normalize_rows(wh * keep + hebb_upd)
        new_wr_ref[0] = _l2_normalize_rows(new_wr)

    return kernel


def _make_subnetwork_call(L, B, D, first_call):
    def per_layer(shape):
        zeros = (0,) * len(shape)
        return pl.BlockSpec((1,) + tuple(shape), lambda l: (l,) + zeros)

    def whole():
        return pl.BlockSpec((B, D), lambda l: (0, 0))

    in_specs = [whole()]                         # stimulus (constant block across layers)
    if not first_call:
        in_specs.append(per_layer((B, D)))       # previous_activation per layer
    in_specs += [
        per_layer((D, D)),                       # hebbian_weights
        per_layer((D, D)),                       # hebbian_recurrent_weights
        per_layer((1, D)),                       # alpha
        per_layer((D, 1)),                       # decay (row scaling, diag(decay) @ W)
        per_layer((1, D)),                       # layer_norm_recurrent.weight
        per_layer((1, D)),                       # layer_norm_recurrent.bias
        per_layer((1, D)),                       # layer_norm_activations.weight
        per_layer((1, D)),                       # layer_norm_activations.bias
    ]
    out_specs = (
        whole(),                                 # final activation
        per_layer((B, D)),                       # per-layer activations (new previous_activation)
        per_layer((D, D)),                       # updated hebbian_weights
        per_layer((D, D)),                       # updated recurrent weights
    )
    out_shape = (
        jax.ShapeDtypeStruct((B, D), jnp.float32),
        jax.ShapeDtypeStruct((L, B, D), jnp.float32),
        jax.ShapeDtypeStruct((L, D, D), jnp.float32),
        jax.ShapeDtypeStruct((L, D, D), jnp.float32),
    )
    wh_in = 1 if first_call else 2
    aliases = {wh_in: 2, wh_in + 1: 3}           # wh -> new_wh, wr -> new_wr (in-place update)

    # Explicit VMEM budget: double-buffered per-layer blocks + resident outputs + temporaries.
    per_step = 4 * (4 * D * D + 4 * B * D + 6 * D)
    vmem_limit = min(max(6 * per_step, 32 * 1024 * 1024), 64 * 1024 * 1024)

    return pl.pallas_call(
        _make_stack_kernel(first_call),
        grid=(L,),
        in_specs=in_specs,
        out_specs=out_specs,
        out_shape=out_shape,
        scratch_shapes=[pltpu.VMEM((B, D), jnp.float32)],   # activation carried across layers
        input_output_aliases=aliases,
        compiler_params=pltpu.CompilerParams(
            dimension_semantics=("arbitrary",),  # layer l+1 depends on layer l's output
            vmem_limit_bytes=vmem_limit,
        ),
    )


@functools.partial(jax.jit, static_argnames=("first_call",), donate_argnames=("wh", "wr"))
def _subnetwork_step(x, prev, wh, wr, alpha, decay, g_rec, b_rec, g_act, b_act, *, first_call):
    L, D, _ = wh.shape
    B = x.shape[0]
    call = _make_subnetwork_call(L, B, D, first_call)
    if first_call:
        return call(x, wh, wr, alpha, decay, g_rec, b_rec, g_act, b_act)
    return call(x, prev, wh, wr, alpha, decay, g_rec, b_rec, g_act, b_act)


def subnetwork_forward(x, state):
    """One SubNetwork.forward.  Returns (output, new_state): the Hebbian weight mutation and
    previous_activation side effects of the PyTorch module are threaded through new_state."""
    first_call = state["prev"] is None
    out, acts, new_wh, new_wr = _subnetwork_step(
        x, state["prev"], state["wh"], state["wr"], state["alpha"], state["decay"],
        state["g_rec"], state["b_rec"], state["g_act"], state["b_act"],
        first_call=first_call)
    new_state = dict(state, wh=new_wh, wr=new_wr, prev=acts)
    return out, new_state


def init_subnetwork_state(key, dim, num_layers, memory_type="short"):
    """Deterministic analogue of SubNetwork.__init__ / HebbianLayer.__init__ (stacked)."""
    wh, wr, alpha, decay = [], [], [], []
    for layer_idx in range(num_layers):
        k_wh, k_wr, k_s, k_d = jax.random.split(jax.random.fold_in(key, layer_idx), 4)
        wh.append(jax.random.normal(k_wh, (dim, dim), dtype=jnp.float32))
        wr.append(jax.random.normal(k_wr, (dim, dim), dtype=jnp.float32))
        if memory_type == "short":
            scaling = jax.random.uniform(k_s, (), minval=1.0, maxval=20.0)
            dec = jax.random.uniform(k_d, (), minval=0.05, maxval=0.35)
        else:
            scaling = jax.random.uniform(k_s, (), minval=0.01, maxval=0.1)
            dec = jax.random.uniform(k_d, (), minval=0.001, maxval=0.01)
        alpha.append(jnp.full((1, dim), scaling, dtype=jnp.float32))
        decay.append(jnp.full((dim, 1), dec, dtype=jnp.float32))
    L = num_layers
    return dict(
        wh=jnp.stack(wh), wr=jnp.stack(wr),
        alpha=jnp.stack(alpha), decay=jnp.stack(decay),
        g_rec=jnp.ones((L, 1, dim), jnp.float32), b_rec=jnp.zeros((L, 1, dim), jnp.float32),
        g_act=jnp.ones((L, 1, dim), jnp.float32), b_act=jnp.zeros((L, 1, dim), jnp.float32),
        prev=None,                                   # previous_activation (None until first forward)
    )


def reference_forward(x, state):
    """Pure-JAX mirror of the kernel math (same dtype policy), used for validation."""
    L, D, _ = state["wh"].shape
    B = x.shape[0]
    prev = state["prev"]
    if prev is None:
        prev = jnp.zeros((L, B, D), jnp.float32)
    acts, new_wh, new_wr = [], [], []
    act = x
    for l in range(L):
        wh, wr = state["wh"][l], state["wr"][l]
        alpha, keep = state["alpha"][l], 1.0 - state["decay"][l]
        stim_c = act.astype(MATMUL_DTYPE)
        stim_out = jnp.dot(stim_c, wh.astype(MATMUL_DTYPE), preferred_element_type=jnp.float32)
        prev_c = prev[l].astype(MATMUL_DTYPE)
        rec_out = jnp.dot(prev_c, wr.astype(MATMUL_DTYPE), preferred_element_type=jnp.float32)
        rec_norm = _layernorm(rec_out, state["g_rec"][l], state["b_rec"][l])
        final = _layernorm(jnp.maximum(stim_out + rec_norm, 0.0),
                           state["g_act"][l], state["b_act"][l])
        hebb_upd = lax.dot_general(stim_c, (stim_out * alpha).astype(MATMUL_DTYPE),
                                   dimension_numbers=(((0,), (0,)), ((), ())),
                                   preferred_element_type=jnp.float32)
        rec_upd = lax.dot_general(prev_c, (rec_out * alpha).astype(MATMUL_DTYPE),
                                  dimension_numbers=(((0,), (0,)), ((), ())),
                                  preferred_element_type=jnp.float32)
        new_wh.append(_l2_normalize_rows(wh * keep + hebb_upd))
        new_wr.append(_l2_normalize_rows(wr * keep + rec_upd))
        acts.append(final)
        act = final
    new_state = dict(state, wh=jnp.stack(new_wh), wr=jnp.stack(new_wr), prev=jnp.stack(acts))
    return act, new_state


if __name__ == "__main__":
    B, D, L = 2, 32, 3
    key = jax.random.PRNGKey(0)
    k_x, k_p = jax.random.split(key)
    x = jax.random.normal(k_x, (B, D), dtype=jnp.float32)
    state0 = init_subnetwork_state(k_p, D, L, memory_type="short")

    # Pure-JAX reference first (the kernel donates / aliases the weight buffers afterwards).
    ref_out1, ref_state = reference_forward(x, state0)
    ref_out2, ref_state = reference_forward(x, ref_state)
    ref_out2 = jax.block_until_ready(ref_out2)

    # Fused Pallas kernel: two stateful forward calls (first: previous_activation is None).
    out1, state = subnetwork_forward(x, state0)
    out2, state = subnetwork_forward(x, state)
    out2 = jax.block_until_ready(out2)
    jax.block_until_ready((state["wh"], state["wr"], state["prev"]))

    assert out1.shape == (B, D) and out2.shape == (B, D) and out2.dtype == jnp.float32
    assert bool(jnp.all(jnp.isfinite(out1))) and bool(jnp.all(jnp.isfinite(out2)))

    def close(a, b):
        return bool(jnp.allclose(a, b, rtol=1e-2, atol=1e-2))

    assert close(out1, ref_out1) and close(out2, ref_out2)
    assert close(state["prev"], ref_state["prev"])
    assert close(state["wh"], ref_state["wh"])
    assert close(state["wr"], ref_state["wr"])
    print("KERNEL_OK")
</pallas_src>

<mosaic_0001>
module attributes {stable_mosaic.version = 11 : i64} {
  func.func @kernel(%arg0: i32, %arg1: memref<2x32xf32, #tpu.memory_space<vmem>>, %arg2: memref<1x32x32xf32, #tpu.memory_space<vmem>>, %arg3: memref<1x32x32xf32, #tpu.memory_space<vmem>>, %arg4: memref<1x1x32xf32, #tpu.memory_space<vmem>>, %arg5: memref<1x32x1xf32, #tpu.memory_space<vmem>>, %arg6: memref<1x1x32xf32, #tpu.memory_space<vmem>>, %arg7: memref<1x1x32xf32, #tpu.memory_space<vmem>>, %arg8: memref<1x1x32xf32, #tpu.memory_space<vmem>>, %arg9: memref<1x1x32xf32, #tpu.memory_space<vmem>>, %arg10: memref<2x32xf32, #tpu.memory_space<vmem>>, %arg11: memref<1x2x32xf32, #tpu.memory_space<vmem>>, %arg12: memref<1x32x32xf32, #tpu.memory_space<vmem>>, %arg13: memref<1x32x32xf32, #tpu.memory_space<vmem>>, %arg14: memref<2x32xf32, #tpu.memory_space<vmem>>) attributes {dimension_semantics = [#tpu.dimension_semantics<arbitrary>], iteration_bounds = array<i64: 3>, scalar_prefetch = 0 : i64, scratch_operands = 1 : i64, tpu.core_type = #tpu.core_type<tc>, window_params = [{pipeline_mode = #tpu.pipeline_mode<synchronous>, transform_indices = @transform_0, window_bounds = array<i64: 2, 32>}, {transform_indices = @transform_1, window_bounds = array<i64: 1, 32, 32>}, {transform_indices = @transform_2, window_bounds = array<i64: 1, 32, 32>}, {transform_indices = @transform_3, window_bounds = array<i64: 1, 1, 32>}, {transform_indices = @transform_4, window_bounds = array<i64: 1, 32, 1>}, {transform_indices = @transform_5, window_bounds = array<i64: 1, 1, 32>}, {transform_indices = @transform_6, window_bounds = array<i64: 1, 1, 32>}, {transform_indices = @transform_7, window_bounds = array<i64: 1, 1, 32>}, {transform_indices = @transform_8, window_bounds = array<i64: 1, 1, 32>}, {pipeline_mode = #tpu.pipeline_mode<synchronous>, transform_indices = @transform_9, window_bounds = array<i64: 2, 32>}, {transform_indices = @transform_10, window_bounds = array<i64: 1, 2, 32>}, {transform_indices = @transform_11, window_bounds = array<i64: 1, 32, 32>}, {transform_indices = @transform_12, window_bounds = array<i64: 1, 32, 32>}]} {
    %c0_i32 = arith.constant 0 : i32
    %0 = arith.cmpi eq, %arg0, %c0_i32 : i32
    %1 = arith.extui %0 : i1 to i32
    %c0_i32_0 = arith.constant 0 : i32
    %2 = arith.cmpi ne, %1, %c0_i32_0 : i32
    scf.if %2 {
      %c0_49 = arith.constant 0 : index
      %c0_50 = arith.constant 0 : index
      %87 = vector.load %arg1[%c0_49, %c0_50] : memref<2x32xf32, #tpu.memory_space<vmem>>, vector<2x32xf32>
      %c0_51 = arith.constant 0 : index
      %c0_52 = arith.constant 0 : index
      %88 = vector.load %arg14[%c0_51, %c0_52] : memref<2x32xf32, #tpu.memory_space<vmem>>, vector<2x32xf32>
      tpu.vector_store %arg14[%c0_51, %c0_52], %87 {strides = array<i32>} : memref<2x32xf32, #tpu.memory_space<vmem>>, vector<2x32xf32>,
    } else {
    }
    %c0 = arith.constant 0 : index
    %c0_1 = arith.constant 0 : index
    %3 = vector.load %arg14[%c0, %c0_1] : memref<2x32xf32, #tpu.memory_space<vmem>>, vector<2x32xf32>
    %c0_2 = arith.constant 0 : index
    %c0_3 = arith.constant 0 : index
    %c0_4 = arith.constant 0 : index
    %4 = vector.load %arg2[%c0_2, %c0_3, %c0_4] : memref<1x32x32xf32, #tpu.memory_space<vmem>>, vector<1x32x32xf32>
    %5 = vector.shape_cast %4 : vector<1x32x32xf32> to vector<32x32xf32>
    %c0_5 = arith.constant 0 : index
    %c0_6 = arith.constant 0 : index
    %c0_7 = arith.constant 0 : index
    %6 = vector.load %arg3[%c0_5, %c0_6, %c0_7] : memref<1x32x32xf32, #tpu.memory_space<vmem>>, vector<1x32x32xf32>
    %7 = vector.shape_cast %6 : vector<1x32x32xf32> to vector<32x32xf32>
    %c0_8 = arith.constant 0 : index
    %c0_9 = arith.constant 0 : index
    %c0_10 = arith.constant 0 : index
    %8 = vector.load %arg4[%c0_8, %c0_9, %c0_10] : memref<1x1x32xf32, #tpu.memory_space<vmem>>, vector<1x1x32xf32>
    %9 = vector.shape_cast %8 : vector<1x1x32xf32> to vector<1x32xf32>
    %c0_11 = arith.constant 0 : index
    %c0_12 = arith.constant 0 : index
    %c0_13 = arith.constant 0 : index
    %10 = vector.load %arg5[%c0_11, %c0_12, %c0_13] : memref<1x32x1xf32, #tpu.memory_space<vmem>>, vector<1x32x1xf32>
    %11 = vector.shape_cast %10 : vector<1x32x1xf32> to vector<32x1xf32>
    %cst = arith.constant 1.000000e+00 : f32
    %12 = vector.broadcast %cst : f32 to vector<32x1xf32>
    %13 = arith.subf %12, %11 : vector<32x1xf32>
    %14 = arith.truncf %3 : vector<2x32xf32> to vector<2x32xbf16>
    %15 = arith.truncf %5 : vector<32x32xf32> to vector<32x32xbf16>
    %cst_14 = arith.constant dense<0.000000e+00> : vector<2x32xf32>
    %16 = tpu.matmul %14, %15, %cst_14 {dimension_numbers = #tpu.dot_dimension_numbers<[1], [0], [0], [1], [0, 0, 1, 1], [], []>} : vector<2x32xbf16>, vector<32x32xbf16>, vector<2x32xf32> -> vector<2x32xf32>
    %c0_15 = arith.constant 0 : index
    %c0_16 = arith.constant 0 : index
    %c0_17 = arith.constant 0 : index
    %17 = vector.load %arg7[%c0_15, %c0_16, %c0_17] : memref<1x1x32xf32, #tpu.memory_space<vmem>>, vector<1x1x32xf32>
    %18 = vector.shape_cast %17 : vector<1x1x32xf32> to vector<1x32xf32>
    %19 = vector.broadcast %13 : vector<32x1xf32> to vector<32x32xf32>
    %20 = arith.mulf %7, %19 : vector<32x32xf32>
    %21 = vector.broadcast %18 : vector<1x32xf32> to vector<2x32xf32>
    %22 = arith.addf %16, %21 : vector<2x32xf32>
    %cst_18 = arith.constant 0.000000e+00 : f32
    %23 = vector.broadcast %cst_18 : f32 to vector<2x32xf32>
    %24 = arith.maximumf %22, %23 : vector<2x32xf32>
    %c0_19 = arith.constant 0 : index
    %c0_20 = arith.constant 0 : index
    %c0_21 = arith.constant 0 : index
    %25 = vector.load %arg8[%c0_19, %c0_20, %c0_21] : memref<1x1x32xf32, #tpu.memory_space<vmem>>, vector<1x1x32xf32>
    %26 = vector.shape_cast %25 : vector<1x1x32xf32> to vector<1x32xf32>
    %c0_22 = arith.constant 0 : index
    %c0_23 = arith.constant 0 : index
    %c0_24 = arith.constant 0 : index
    %27 = vector.load %arg9[%c0_22, %c0_23, %c0_24] : memref<1x1x32xf32, #tpu.memory_space<vmem>>, vector<1x1x32xf32>
    %28 = vector.shape_cast %27 : vector<1x1x32xf32> to vector<1x32xf32>
    %cst_25 = arith.constant dense<0.000000e+00> : vector<2xf32>
    %29 = vector.multi_reduction <add>, %24, %cst_25 [1] : vector<2x32xf32> to vector<2xf32>
    %30 = vector.shape_cast %29 : vector<2xf32> to vector<2x1xf32>
    %cst_26 = arith.constant 3.200000e+01 : f32
    %31 = vector.broadcast %cst_26 : f32 to vector<2x1xf32>
    %32 = arith.divf %30, %31 : vector<2x1xf32>
    %33 = arith.mulf %24, %24 : vector<2x32xf32>
    %cst_27 = arith.constant dense<0.000000e+00> : vector<2xf32>
    %34 = vector.multi_reduction <add>, %33, %cst_27 [1] : vector<2x32xf32> to vector<2xf32>
    %35 = vector.shape_cast %34 : vector<2xf32> to vector<2x1xf32>
    %cst_28 = arith.constant 3.200000e+01 : f32
    %36 = vector.broadcast %cst_28 : f32 to vector<2x1xf32>
    %37 = arith.divf %35, %36 : vector<2x1xf32>
    %38 = arith.mulf %32, %32 : vector<2x1xf32>
    %39 = arith.subf %37, %38 : vector<2x1xf32>
    %cst_29 = arith.constant 0.000000e+00 : f32
    %40 = vector.broadcast %cst_29 : f32 to vector<2x1xf32>
    %41 = arith.maximumf %39, %40 : vector<2x1xf32>
    %42 = vector.broadcast %32 : vector<2x1xf32> to vector<2x32xf32>
    %43 = arith.subf %24, %42 : vector<2x32xf32>
    %cst_30 = arith.constant 9.99999974E-6 : f32
    %44 = vector.broadcast %cst_30 : f32 to vector<2x1xf32>
    %45 = arith.addf %41, %44 : vector<2x1xf32>
    %46 = math.rsqrt %45 : vector<2x1xf32>
    %47 = vector.broadcast %46 : vector<2x1xf32> to vector<2x32xf32>
    %48 = arith.mulf %43, %47 : vector<2x32xf32>
    %49 = vector.broadcast %26 : vector<1x32xf32> to vector<2x32xf32>
    %50 = arith.mulf %48, %49 : vector<2x32xf32>
    %51 = vector.broadcast %28 : vector<1x32xf32> to vector<2x32xf32>
    %52 = arith.addf %50, %51 : vector<2x32xf32>
    %c0_31 = arith.constant 0 : index
    %c0_32 = arith.constant 0 : index
    %53 = vector.load %arg14[%c0_31, %c0_32] : memref<2x32xf32, #tpu.memory_space<vmem>>, vector<2x32xf32>
    tpu.vector_store %arg14[%c0_31, %c0_32], %52 {strides = array<i32>} : memref<2x32xf32, #tpu.memory_space<vmem>>, vector<2x32xf32>,
    %c0_33 = arith.constant 0 : index
    %c0_34 = arith.constant 0 : index
    %c0_35 = arith.constant 0 : index
    %54 = vector.load %arg11[%c0_33, %c0_34, %c0_35] : memref<1x2x32xf32, #tpu.memory_space<vmem>>, vector<1x2x32xf32>
    %55 = vector.shape_cast %54 : vector<1x2x32xf32> to vector<2x32xf32>
    %56 = vector.shape_cast %52 : vector<2x32xf32> to vector<1x2x32xf32>
    tpu.vector_store %arg11[%c0_33, %c0_34, %c0_35], %56 {strides = array<i32>} : memref<1x2x32xf32, #tpu.memory_space<vmem>>, vector<1x2x32xf32>,
    %c0_36 = arith.constant 0 : index
    %c0_37 = arith.constant 0 : index
    %57 = vector.load %arg10[%c0_36, %c0_37] : memref<2x32xf32, #tpu.memory_space<vmem>>, vector<2x32xf32>
    tpu.vector_store %arg10[%c0_36, %c0_37], %52 {strides = array<i32>} : memref<2x32xf32, #tpu.memory_space<vmem>>, vector<2x32xf32>,
    %58 = vector.broadcast %9 : vector<1x32xf32> to vector<2x32xf32>
    %59 = arith.mulf %16, %58 : vector<2x32xf32>
    %60 = arith.truncf %59 : vector<2x32xf32> to vector<2x32xbf16>
    %cst_38 = arith.constant dense<0.000000e+00> : vector<32x32xf32>
    %61 = tpu.matmul %14, %60, %cst_38 {dimension_numbers = #tpu.dot_dimension_numbers<[0], [0], [1], [1], [0, 1, 1, 1], [], []>} : vector<2x32xbf16>, vector<2x32xbf16>, vector<32x32xf32> -> vector<32x32xf32>
    %62 = vector.broadcast %13 : vector<32x1xf32> to vector<32x32xf32>
    %63 = arith.mulf %5, %62 : vector<32x32xf32>
    %64 = arith.addf %63, %61 : vector<32x32xf32>
    %65 = arith.mulf %64, %64 : vector<32x32xf32>
    %cst_39 = arith.constant dense<0.000000e+00> : vector<32xf32>
    %66 = vector.multi_reduction <add>, %65, %cst_39 [1] : vector<32x32xf32> to vector<32xf32>
    %67 = vector.shape_cast %66 : vector<32xf32> to vector<32x1xf32>
    %cst_40 = arith.constant 1.000000e-24 : f32
    %68 = vector.broadcast %cst_40 : f32 to vector<32x1xf32>
    %69 = arith.maximumf %67, %68 : vector<32x1xf32>
    %70 = math.rsqrt %69 : vector<32x1xf32>
    %71 = vector.broadcast %70 : vector<32x1xf32> to vector<32x32xf32>
    %72 = arith.mulf %64, %71 : vector<32x32xf32>
    %c0_41 = arith.constant 0 : index
    %c0_42 = arith.constant 0 : index
    %c0_43 = arith.constant 0 : index
    %73 = vector.load %arg12[%c0_41, %c0_42, %c0_43] : memref<1x32x32xf32, #tpu.memory_space<vmem>>, vector<1x32x32xf32>
    %74 = vector.shape_cast %73 : vector<1x32x32xf32> to vector<32x32xf32>
    %75 = vector.shape_cast %72 : vector<32x32xf32> to vector<1x32x32xf32>
    tpu.vector_store %arg12[%c0_41, %c0_42, %c0_43], %75 {strides = array<i32>} : memref<1x32x32xf32, #tpu.memory_space<vmem>>, vector<1x32x32xf32>,
    %76 = arith.mulf %20, %20 : vector<32x32xf32>
    %cst_44 = arith.constant dense<0.000000e+00> : vector<32xf32>
    %77 = vector.multi_reduction <add>, %76, %cst_44 [1] : vector<32x32xf32> to vector<32xf32>
    %78 = vector.shape_cast %77 : vector<32xf32> to vector<32x1xf32>
    %cst_45 = arith.constant 1.000000e-24 : f32
    %79 = vector.broadcast %cst_45 : f32 to vector<32x1xf32>
    %80 = arith.maximumf %78, %79 : vector<32x1xf32>
    %81 = math.rsqrt %80 : vector<32x1xf32>
    %82 = vector.broadcast %81 : vector<32x1xf32> to vector<32x32xf32>
    %83 = arith.mulf %20, %82 : vector<32x32xf32>
    %c0_46 = arith.constant 0 : index
    %c0_47 = arith.constant 0 : index
    %c0_48 = arith.constant 0 : index
    %84 = vector.load %arg13[%c0_46, %c0_47, %c0_48] : memref<1x32x32xf32, #tpu.memory_space<vmem>>, vector<1x32x32xf32>
    %85 = vector.shape_cast %84 : vector<1x32x32xf32> to vector<32x32xf32>
    %86 = vector.shape_cast %83 : vector<32x32xf32> to vector<1x32x32xf32>
    tpu.vector_store %arg13[%c0_46, %c0_47, %c0_48], %86 {strides = array<i32>} : memref<1x32x32xf32, #tpu.memory_space<vmem>>, vector<1x32x32xf32>,
    return
  }
  func.func @transform_0(%arg0: i32) -> (i32, i32) {
    %c0_i32 = arith.constant 0 : i32
    %c0_i32_0 = arith.constant 0 : i32
    %c0_i32_1 = arith.constant 0 : i32
    return %c0_i32, %c0_i32_0 : i32, i32
  }
  func.func @transform_1(%arg0: i32) -> (i32, i32, i32) {
    %c0_i32 = arith.constant 0 : i32
    %c0_i32_0 = arith.constant 0 : i32
    %c0_i32_1 = arith.constant 0 : i32
    return %arg0, %c0_i32, %c0_i32_0 : i32, i32, i32
  }
  func.func @transform_2(%arg0: i32) -> (i32, i32, i32) {
    %c0_i32 = arith.constant 0 : i32
    %c0_i32_0 = arith.constant 0 : i32
    %c0_i32_1 = arith.constant 0 : i32
    return %arg0, %c0_i32, %c0_i32_0 : i32, i32, i32
  }
  func.func @transform_3(%arg0: i32) -> (i32, i32, i32) {
    %c0_i32 = arith.constant 0 : i32
    %c0_i32_0 = arith.constant 0 : i32
    %c0_i32_1 = arith.constant 0 : i32
    return %arg0, %c0_i32, %c0_i32_0 : i32, i32, i32
  }
  func.func @transform_4(%arg0: i32) -> (i32, i32, i32) {
    %c0_i32 = arith.constant 0 : i32
    %c0_i32_0 = arith.constant 0 : i32
    %c0_i32_1 = arith.constant 0 : i32
    return %arg0, %c0_i32, %c0_i32_0 : i32, i32, i32
  }
  func.func @transform_5(%arg0: i32) -> (i32, i32, i32) {
    %c0_i32 = arith.constant 0 : i32
    %c0_i32_0 = arith.constant 0 : i32
    %c0_i32_1 = arith.constant 0 : i32
    return %arg0, %c0_i32, %c0_i32_0 : i32, i32, i32
  }
  func.func @transform_6(%arg0: i32) -> (i32, i32, i32) {
    %c0_i32 = arith.constant 0 : i32
    %c0_i32_0 = arith.constant 0 : i32
    %c0_i32_1 = arith.constant 0 : i32
    return %arg0, %c0_i32, %c0_i32_0 : i32, i32, i32
  }
  func.func @transform_7(%arg0: i32) -> (i32, i32, i32) {
    %c0_i32 = arith.constant 0 : i32
    %c0_i32_0 = arith.constant 0 : i32
    %c0_i32_1 = arith.constant 0 : i32
    return %arg0, %c0_i32, %c0_i32_0 : i32, i32, i32
  }
  func.func @transform_8(%arg0: i32) -> (i32, i32, i32) {
    %c0_i32 = arith.constant 0 : i32
    %c0_i32_0 = arith.constant 0 : i32
    %c0_i32_1 = arith.constant 0 : i32
    return %arg0, %c0_i32, %c0_i32_0 : i32, i32, i32
  }
  func.func @transform_9(%arg0: i32) -> (i32, i32) {
    %c0_i32 = arith.constant 0 : i32
    %c0_i32_0 = arith.constant 0 : i32
    %c0_i32_1 = arith.constant 0 : i32
    return %c0_i32, %c0_i32_0 : i32, i32
  }
  func.func @transform_10(%arg0: i32) -> (i32, i32, i32) {
    %c0_i32 = arith.constant 0 : i32
    %c0_i32_0 = arith.constant 0 : i32
    %c0_i32_1 = arith.constant 0 : i32
    return %arg0, %c0_i32, %c0_i32_0 : i32, i32, i32
  }
  func.func @transform_11(%arg0: i32) -> (i32, i32, i32) {
    %c0_i32 = arith.constant 0 : i32
    %c0_i32_0 = arith.constant 0 : i32
    %c0_i32_1 = arith.constant 0 : i32
    return %arg0, %c0_i32, %c0_i32_0 : i32, i32, i32
  }
  func.func @transform_12(%arg0: i32) -> (i32, i32, i32) {
    %c0_i32 = arith.constant 0 : i32
    %c0_i32_0 = arith.constant 0 : i32
    %c0_i32_1 = arith.constant 0 : i32
    return %arg0, %c0_i32, %c0_i32_0 : i32, i32, i32
  }
}

</mosaic_0001>

<llo_original>
// kernel: _subnetwork_step.1
$region0: #{_subnetwork_step.1}
  #allocation0 [shape = 'u32[]', space=smem, size = 0x4, offset = 0x4, fixed_abs, tag = 'smem constant byte address 0x4 - core index']
  #allocation1 [shape = 'u32[144,128]{1,0:T(1,128)}', space=vmem, size = 0x12000, scoped, tag = 'internal scratch']
  #allocation2 [shape = 'f32[2,32]{1,0:T(2,128)}', space=vmem, size = 0x400, scoped, tag = 'scratch operand']
  %s0 = inlined_call_operand.vmem [shape: f32[2,32], index: 0, kind: input, shape index: {}]
  %s1 = inlined_call_operand.hbm [shape: f32[3,32,32], index: 1, kind: input, shape index: {}, may-alias: {1,11}]
  %s2 = inlined_call_operand.hbm [shape: f32[3,32,32], index: 2, kind: input, shape index: {}, may-alias: {2,12}]
  %s3 = inlined_call_operand.vmem [shape: f32[3,1,32], index: 3, kind: input, shape index: {}]
  %s4 = inlined_call_operand.vmem [shape: f32[3,32,1], index: 4, kind: input, shape index: {}]
  %s5 = inlined_call_operand.vmem [shape: f32[3,1,32], index: 5, kind: input, shape index: {}]
  %s6 = inlined_call_operand.vmem [shape: f32[3,1,32], index: 6, kind: input, shape index: {}]
  %s7 = inlined_call_operand.vmem [shape: f32[3,1,32], index: 7, kind: input, shape index: {}]
  %s8 = inlined_call_operand.vmem [shape: f32[3,1,32], index: 8, kind: input, shape index: {}]
  %s9 = inlined_call_operand.hbm [shape: f32[2,32], index: 9, kind: output, shape index: {0}]
  %s10 = inlined_call_operand.hbm [shape: f32[3,2,32], index: 10, kind: output, shape index: {1}]
  %s11 = inlined_call_operand.hbm [shape: f32[3,32,32], index: 11, kind: output, shape index: {2}, may-alias: {1,11}]
  %s12 = inlined_call_operand.hbm [shape: f32[3,32,32], index: 12, kind: output, shape index: {3}, may-alias: {2,12}]
  %13 = xla_tuple %s9, %s10, %s11, %s12
  %s14 = sld [smem:[#allocation0]]
  $region105: #{_subnetwork_step.1} parent=0
    _
  %s16 = ssub.s32 1, %s14
  %s17 = scalar_select 0, %s16, %s14
  $region1: #{_subnetwork_step.1} parent=0
    #allocation3 [shape = 'u8[32768]{0}', space=vmem, size = 0x8000, scoped, tag = 'input window, operand 1']
    #allocation4 [shape = 's32[2]{0}', space=sflag, size = 0x8, scoped, tag = 'scoped memory for _subnetwork_step.1']
    #allocation5 [shape = 's32[2]{0}', space=sflag, size = 0x8, scoped, tag = 'scoped memory for _subnetwork_step.1']
    #allocation6 [shape = 'u8[32768]{0}', space=vmem, size = 0x8000, scoped, tag = 'input window, operand 2']
    #allocation7 [shape = 's32[2]{0}', space=sflag, size = 0x8, scoped, tag = 'scoped memory for _subnetwork_step.1']
    #allocation8 [shape = 'u8[1024]{0}', space=vmem, size = 0x400, scoped, tag = 'output window, operand 0, single buffered']
    #allocation9 [shape = 'u8[2048]{0}', space=vmem, size = 0x800, scoped, tag = 'output window, operand 1']
    #allocation10 [shape = 's32[2]{0}', space=sflag, size = 0x8, scoped, tag = 'scoped memory for _subnetwork_step.1']
    #allocation11 [shape = 'u8[32768]{0}', space=vmem, size = 0x8000, scoped, tag = 'output window, operand 2']
    #allocation12 [shape = 'u8[32768]{0}', space=vmem, size = 0x8000, scoped, tag = 'output window, operand 3']
    #allocation13 [shape = 's32[2]{0}', space=sflag, size = 0x8, scoped, tag = 'scoped memory for _subnetwork_step.1']
    %18 = vsyncpa [#allocation4], 0
    %s19 = scalar_lea.sflag [#allocation4], 1
    %20 = vsyncpa %s19, 0
    %21 = vsyncpa [#allocation7], 0
    %s22 = scalar_lea.sflag [#allocation7], 1
    %23 = vsyncpa %s22, 0
    %24 = vsyncpa [#allocation5], 0
    %25 = vsyncpa [#allocation10], 0
    %s26 = scalar_lea.sflag [#allocation10], 1
    %27 = vsyncpa %s26, 0
    %28 = vsyncpa [#allocation13], 0
    %s29 = scalar_lea.sflag [#allocation13], 1
    %30 = vsyncpa %s29, 0
    loop: start=0, step=1, limit=5
    $region2: #{_subnetwork_step.1} parent=1 // loop_pre_header
      _
    $region3: #{_subnetwork_step.1} parent=1 // loop_header
      %s32 = sphi 0, %s36
      %p33 = scmp.ge.s32.totalorder %s32, 5
      %s40 = sphi 0, %s40
      %s42 = sphi 0, %s40
      %s43 = sphi 0, %s42
      %s57 = sphi 0, %s43
      %s63 = sphi 0, %s65
      %s66 = sphi 0, %s63
      %s67 = sphi 0, %s66
      %s83 = sphi 0, %s67
      %s89 = sphi 0, %s91
      %s92 = sphi 0, %s89
      %s93 = sphi 0, %s92
      %s109 = sphi 0, %s93
      %s115 = sphi 0, %s117
      %s118 = sphi 0, %s115
      %s119 = sphi 0, %s118
      %s135 = sphi 0, %s119
      %s141 = sphi 0, %s143
      %s144 = sphi 0, %s141
      %s145 = sphi 0, %s144
      %s161 = sphi 0, %s145
      %s167 = sphi 0, %s169
      %s170 = sphi 0, %s167
      %s171 = sphi 0, %s170
      %s187 = sphi 0, %s171
      %s193 = sphi 0, %s195
      %s196 = sphi 0, %s193
      %s197 = sphi 0, %s196
      %s213 = sphi 0, %s197
      %s219 = sphi 0, %s221
      %s222 = sphi 0, %s219
      %s223 = sphi 0, %s222
      %s239 = sphi 0, %s223
      %s245 = sphi 0, %s247
      %s248 = sphi 0, %s245
      %s249 = sphi 0, %s248
      %s265 = sphi 0, %s249
      %s269 = sphi 0, %s269
      %s271 = sphi 0, %s269
      %s272 = sphi 0, %s271
      %s286 = sphi 0, %s272
      %s292 = sphi 0, %s294
      %s295 = sphi 0, %s292
      %s296 = sphi 0, %s295
      %s312 = sphi 0, %s296
      %s318 = sphi 0, %s320
      %s321 = sphi 0, %s318
      %s322 = sphi 0, %s321
      %s338 = sphi 0, %s322
      %s344 = sphi 0, %s346
      %s347 = sphi 0, %s344
      %s348 = sphi 0, %s347
      %s364 = sphi 0, %s348
    $region4: #{_subnetwork_step.1} parent=1 // loop_header_branch
      %35 = sbr.rel (%p33) target = $region8
    $region5: #{_subnetwork_step.1} parent=1 // loop_body
      %s37 = ssub.s32 %s32, 1
      %s38 = ssub.s32 %s32, 2
      %s39 = sadd.s32 %s32, 1
      %s41 = sadd.s32 %s40, 1
      %p44 = scmp.eq.s32.totalorder %s32, 2
      %p45 = scmp.ne.s32.totalorder %s40, %s42
      %p46 = scmp.eq.s32.totalorder %s32, 0
      %p47 = por %p45, %p46
      %p48 = scmp.ne.s32.totalorder %s40, %s42
      %p49 = scmp.eq.s32.totalorder %s37, 2
      %p50 = por %p48, %p49
      %p51 = scmp.ne.s32.totalorder %s42, %s43
      %p52 = scmp.eq.s32.totalorder %s37, 0
      %p53 = por %p51, %p52
      %p54 = scmp.ne.s32.totalorder %s42, %s43
      %p55 = scmp.eq.s32.totalorder %s38, 2
      %p56 = por %p54, %p55
      %p58 = scmp.ne.s32.totalorder %s43, %s57
      %p59 = scmp.eq.s32.totalorder %s38, 0
      %p60 = por %p58, %p59
      %s61 = ssub.s32 %s32, %s39
      %p62 = scmp.eq.s32.totalorder %s61, 0
      %s64 = sadd.s32 %s63, 1
      %s65 = scalar_select %p62, %s63, %s64
      %p68 = pneg %p62
      %p69 = scmp.eq.s32.totalorder %s32, 2
      %p70 = por %p68, %p69
      %p71 = scmp.ne.s32.totalorder %s63, %s66
      %p72 = scmp.eq.s32.totalorder %s32, 0
      %p73 = por %p71, %p72
      %p74 = scmp.ne.s32.totalorder %s63, %s66
      %p75 = scmp.eq.s32.totalorder %s37, 2
      %p76 = por %p74, %p75
      %p77 = scmp.ne.s32.totalorder %s66, %s67
      %p78 = scmp.eq.s32.totalorder %s37, 0
      %p79 = por %p77, %p78
      %p80 = scmp.ne.s32.totalorder %s66, %s67
      %p81 = scmp.eq.s32.totalorder %s38, 2
      %p82 = por %p80, %p81
      %p84 = scmp.ne.s32.totalorder %s67, %s83
      %p85 = scmp.eq.s32.totalorder %s38, 0
      %p86 = por %p84, %p85
      %s87 = ssub.s32 %s32, %s39
      %p88 = scmp.eq.s32.totalorder %s87, 0
      %s90 = sadd.s32 %s89, 1
      %s91 = scalar_select %p88, %s89, %s90
      %p94 = pneg %p88
      %p95 = scmp.eq.s32.totalorder %s32, 2
      %p96 = por %p94, %p95
      %p97 = scmp.ne.s32.totalorder %s89, %s92
      %p98 = scmp.eq.s32.totalorder %s32, 0
      %p99 = por %p97, %p98
      %p100 = scmp.ne.s32.totalorder %s89, %s92
      %p101 = scmp.eq.s32.totalorder %s37, 2
      %p102 = por %p100, %p101
      %p103 = scmp.ne.s32.totalorder %s92, %s93
      %p104 = scmp.eq.s32.totalorder %s37, 0
      %p105 = por %p103, %p104
      %p106 = scmp.ne.s32.totalorder %s92, %s93
      %p107 = scmp.eq.s32.totalorder %s38, 2
      %p108 = por %p106, %p107
      %p110 = scmp.ne.s32.totalorder %s93, %s109
      %p111 = scmp.eq.s32.totalorder %s38, 0
      %p112 = por %p110, %p111
      %s113 = ssub.s32 %s32, %s39
      %p114 = scmp.eq.s32.totalorder %s113, 0
      %s116 = sadd.s32 %s115, 1
      %s117 = scalar_select %p114, %s115, %s116
      %p120 = pneg %p114
      %p121 = scmp.eq.s32.totalorder %s32, 2
      %p122 = por %p120, %p121
      %p123 = scmp.ne.s32.totalorder %s115, %s118
      %p124 = scmp.eq.s32.totalorder %s32, 0
      %p125 = por %p123, %p124
      %p126 = scmp.ne.s32.totalorder %s115, %s118
      %p127 = scmp.eq.s32.totalorder %s37, 2
      %p128 = por %p126, %p127
      %p129 = scmp.ne.s32.totalorder %s118, %s119
      %p130 = scmp.eq.s32.totalorder %s37, 0
      %p131 = por %p129, %p130
      %p132 = scmp.ne.s32.totalorder %s118, %s119
      %p133 = scmp.eq.s32.totalorder %s38, 2
      %p134 = por %p132, %p133
      %p136 = scmp.ne.s32.totalorder %s119, %s135
      %p137 = scmp.eq.s32.totalorder %s38, 0
      %p138 = por %p136, %p137
      %s139 = ssub.s32 %s32, %s39
      %p140 = scmp.eq.s32.totalorder %s139, 0
      %s142 = sadd.s32 %s141, 1
      %s143 = scalar_select %p140, %s141, %s142
      %p146 = pneg %p140
      %p147 = scmp.eq.s32.totalorder %s32, 2
      %p148 = por %p146, %p147
      %p149 = scmp.ne.s32.totalorder %s141, %s144
      %p150 = scmp.eq.s32.totalorder %s32, 0
      %p151 = por %p149, %p150
      %p152 = scmp.ne.s32.totalorder %s141, %s144
      %p153 = scmp.eq.s32.totalorder %s37, 2
      %p154 = por %p152, %p153
      %p155 = scmp.ne.s32.totalorder %s144, %s145
      %p156 = scmp.eq.s32.totalorder %s37, 0
      %p157 = por %p155, %p156
      %p158 = scmp.ne.s32.totalorder %s144, %s145
      %p159 = scmp.eq.s32.totalorder %s38, 2
      %p160 = por %p158, %p159
      %p162 = scmp.ne.s32.totalorder %s145, %s161
      %p163 = scmp.eq.s32.totalorder %s38, 0
      %p164 = por %p162, %p163
      %s165 = ssub.s32 %s32, %s39
      %p166 = scmp.eq.s32.totalorder %s165, 0
      %s168 = sadd.s32 %s167, 1
      %s169 = scalar_select %p166, %s167, %s168
      %p172 = pneg %p166
      %p173 = scmp.eq.s32.totalorder %s32, 2
      %p174 = por %p172, %p173
      %p175 = scmp.ne.s32.totalorder %s167, %s170
      %p176 = scmp.eq.s32.totalorder %s32, 0
      %p177 = por %p175, %p176
      %p178 = scmp.ne.s32.totalorder %s167, %s170
      %p179 = scmp.eq.s32.totalorder %s37, 2
      %p180 = por %p178, %p179
      %p181 = scmp.ne.s32.totalorder %s170, %s171
      %p182 = scmp.eq.s32.totalorder %s37, 0
      %p183 = por %p181, %p182
      %p184 = scmp.ne.s32.totalorder %s170, %s171
      %p185 = scmp.eq.s32.totalorder %s38, 2
      %p186 = por %p184, %p185
      %p188 = scmp.ne.s32.totalorder %s171, %s187
      %p189 = scmp.eq.s32.totalorder %s38, 0
      %p190 = por %p188, %p189
      %s191 = ssub.s32 %s32, %s39
      %p192 = scmp.eq.s32.totalorder %s191, 0
      %s194 = sadd.s32 %s193, 1
      %s195 = scalar_select %p192, %s193, %s194
      %p198 = pneg %p192
      %p199 = scmp.eq.s32.totalorder %s32, 2
      %p200 = por %p198, %p199
      %p201 = scmp.ne.s32.totalorder %s193, %s196
      %p202 = scmp.eq.s32.totalorder %s32, 0
      %p203 = por %p201, %p202
      %p204 = scmp.ne.s32.totalorder %s193, %s196
      %p205 = scmp.eq.s32.totalorder %s37, 2
      %p206 = por %p204, %p205
      %p207 = scmp.ne.s32.totalorder %s196, %s197
      %p208 = scmp.eq.s32.totalorder %s37, 0
      %p209 = por %p207, %p208
      %p210 = scmp.ne.s32.totalorder %s196, %s197
      %p211 = scmp.eq.s32.totalorder %s38, 2
      %p212 = por %p210, %p211
      %p214 = scmp.ne.s32.totalorder %s197, %s213
      %p215 = scmp.eq.s32.totalorder %s38, 0
      %p216 = por %p214, %p215
      %s217 = ssub.s32 %s32, %s39
      %p218 = scmp.eq.s32.totalorder %s217, 0
      %s220 = sadd.s32 %s219, 1
      %s221 = scalar_select %p218, %s219, %s220
      %p224 = pneg %p218
      %p225 = scmp.eq.s32.totalorder %s32, 2
      %p226 = por %p224, %p225
      %p227 = scmp.ne.s32.totalorder %s219, %s222
      %p228 = scmp.eq.s32.totalorder %s32, 0
      %p229 = por %p227, %p228
      %p230 = scmp.ne.s32.totalorder %s219, %s222
      %p231 = scmp.eq.s32.totalorder %s37, 2
      %p232 = por %p230, %p231
      %p233 = scmp.ne.s32.totalorder %s222, %s223
      %p234 = scmp.eq.s32.totalorder %s37, 0
      %p235 = por %p233, %p234
      %p236 = scmp.ne.s32.totalorder %s222, %s223
      %p237 = scmp.eq.s32.totalorder %s38, 2
      %p238 = por %p236, %p237
      %p240 = scmp.ne.s32.totalorder %s223, %s239
      %p241 = scmp.eq.s32.totalorder %s38, 0
      %p242 = por %p240, %p241
      %s243 = ssub.s32 %s32, %s39
      %p244 = scmp.eq.s32.totalorder %s243, 0
      %s246 = sadd.s32 %s245, 1
      %s247 = scalar_select %p244, %s245, %s246
      %p250 = pneg %p244
      %p251 = scmp.eq.s32.totalorder %s32, 2
      %p252 = por %p250, %p251
      %p253 = scmp.ne.s32.totalorder %s245, %s248
      %p254 = scmp.eq.s32.totalorder %s32, 0
      %p255 = por %p253, %p254
      %p256 = scmp.ne.s32.totalorder %s245, %s248
      %p257 = scmp.eq.s32.totalorder %s37, 2
      %p258 = por %p256, %p257
      %p259 = scmp.ne.s32.totalorder %s248, %s249
      %p260 = scmp.eq.s32.totalorder %s37, 0
      %p261 = por %p259, %p260
      %p262 = scmp.ne.s32.totalorder %s248, %s249
      %p263 = scmp.eq.s32.totalorder %s38, 2
      %p264 = por %p262, %p263
      %p266 = scmp.ne.s32.totalorder %s249, %s265
      %p267 = scmp.eq.s32.totalorder %s38, 0
      %p268 = por %p266, %p267
      %s270 = sadd.s32 %s269, 1
      %p273 = scmp.eq.s32.totalorder %s32, 2
      %p274 = scmp.ne.s32.totalorder %s269, %s271
      %p275 = scmp.eq.s32.totalorder %s32, 0
      %p276 = por %p274, %p275
      %p277 = scmp.ne.s32.totalorder %s269, %s271
      %p278 = scmp.eq.s32.totalorder %s37, 2
      %p279 = por %p277, %p278
      %p280 = scmp.ne.s32.totalorder %s271, %s272
      %p281 = scmp.eq.s32.totalorder %s37, 0
      %p282 = por %p280, %p281
      %p283 = scmp.ne.s32.totalorder %s271, %s272
      %p284 = scmp.eq.s32.totalorder %s38, 2
      %p285 = por %p283, %p284
      %p287 = scmp.ne.s32.totalorder %s272, %s286
      %p288 = scmp.eq.s32.totalorder %s38, 0
      %p289 = por %p287, %p288
      %s290 = ssub.s32 %s32, %s39
      %p291 = scmp.eq.s32.totalorder %s290, 0
      %s293 = sadd.s32 %s292, 1
      %s294 = scalar_select %p291, %s292, %s293
      %p297 = pneg %p291
      %p298 = scmp.eq.s32.totalorder %s32, 2
      %p299 = por %p297, %p298
      %p300 = scmp.ne.s32.totalorder %s292, %s295
      %p301 = scmp.eq.s32.totalorder %s32, 0
      %p302 = por %p300, %p301
      %p303 = scmp.ne.s32.totalorder %s292, %s295
      %p304 = scmp.eq.s32.totalorder %s37, 2
      %p305 = por %p303, %p304
      %p306 = scmp.ne.s32.totalorder %s295, %s296
      %p307 = scmp.eq.s32.totalorder %s37, 0
      %p308 = por %p306, %p307
      %p309 = scmp.ne.s32.totalorder %s295, %s296
      %p310 = scmp.eq.s32.totalorder %s38, 2
      %p311 = por %p309, %p310
      %p313 = scmp.ne.s32.totalorder %s296, %s312
      %p314 = scmp.eq.s32.totalorder %s38, 0
      %p315 = por %p313, %p314
      %s316 = ssub.s32 %s32, %s39
      %p317 = scmp.eq.s32.totalorder %s316, 0
      %s319 = sadd.s32 %s318, 1
      %s320 = scalar_select %p317, %s318, %s319
      %p323 = pneg %p317
      %p324 = scmp.eq.s32.totalorder %s32, 2
      %p325 = por %p323, %p324
      %p326 = scmp.ne.s32.totalorder %s318, %s321
      %p327 = scmp.eq.s32.totalorder %s32, 0
      %p328 = por %p326, %p327
      %p329 = scmp.ne.s32.totalorder %s318, %s321
      %p330 = scmp.eq.s32.totalorder %s37, 2
      %p331 = por %p329, %p330
      %p332 = scmp.ne.s32.totalorder %s321, %s322
      %p333 = scmp.eq.s32.totalorder %s37, 0
      %p334 = por %p332, %p333
      %p335 = scmp.ne.s32.totalorder %s321, %s322
      %p336 = scmp.eq.s32.totalorder %s38, 2
      %p337 = por %p335, %p336
      %p339 = scmp.ne.s32.totalorder %s322, %s338
      %p340 = scmp.eq.s32.totalorder %s38, 0
      %p341 = por %p339, %p340
      %s342 = ssub.s32 %s32, %s39
      %p343 = scmp.eq.s32.totalorder %s342, 0
      %s345 = sadd.s32 %s344, 1
      %s346 = scalar_select %p343, %s344, %s345
      %p349 = pneg %p343
      %p350 = scmp.eq.s32.totalorder %s32, 2
      %p351 = por %p349, %p350
      %p352 = scmp.ne.s32.totalorder %s344, %s347
      %p353 = scmp.eq.s32.totalorder %s32, 0
      %p354 = por %p352, %p353
      %p355 = scmp.ne.s32.totalorder %s344, %s347
      %p356 = scmp.eq.s32.totalorder %s37, 2
      %p357 = por %p355, %p356
      %p358 = scmp.ne.s32.totalorder %s347, %s348
      %p359 = scmp.eq.s32.totalorder %s37, 0
      %p360 = por %p358, %p359
      %p361 = scmp.ne.s32.totalorder %s347, %s348
      %p362 = scmp.eq.s32.totalorder %s38, 2
      %p363 = por %p361, %p362
      %p365 = scmp.ne.s32.totalorder %s348, %s364
      %p366 = scmp.eq.s32.totalorder %s38, 0
      %p367 = por %p365, %p366
      %p368 = scmp.le.s32.totalorder 1, %s32
      %p369 = scmp.lt.s32.totalorder %s32, 4
      %p370 = pnand %p368, %p369
      %p371 = pneg %p370
      // Predicated region
      $region9: #{_subnetwork_step.1} parent=5 // pred_check
        _
      $region10: #{_subnetwork_step.1} parent=5 // pred_check_branch
        %373 = sbr.rel (%p370) target = $region12
      $region11: #{_subnetwork_step.1} parent=5 // pred_region
        %s374 = ssub.s32 %s32, 1
        // Predicated region
        $region13: #{_subnetwork_step.1} parent=11 // pred_check
          %p375 = pneg %p53
        $region14: #{_subnetwork_step.1} parent=11 // pred_check_branch
          %377 = sbr.rel (%p375) target = $region16
        $region15: #{_subnetwork_step.1} parent=11 // pred_region
          _
        $region16: #{_subnetwork_step.1} parent=11 // pred_fallthru
          _
      $region12: #{_subnetwork_step.1} parent=5 // pred_fallthru
        _
      %p378 = scmp.lt.s32.totalorder %s32, 3
      // Predicated region
      $region17: #{_subnetwork_step.1} parent=5 // pred_check
        %p379 = pneg %p378
      $region18: #{_subnetwork_step.1} parent=5 // pred_check_branch
        %381 = sbr.rel (%p379) target = $region20
      $region19: #{_subnetwork_step.1} parent=5 // pred_region
        // Predicated region
        $region21: #{_subnetwork_step.1} parent=19 // pred_check
          %p382 = pneg %p73
        $region22: #{_subnetwork_step.1} parent=19 // pred_check_branch
          %384 = sbr.rel (%p382) target = $region24
        $region23: #{_subnetwork_step.1} parent=19 // pred_region
          %s385 = sand.u32 %s63, 1
          %s386 = scalar_lea.sflag [#allocation4], %s385
          %s387 = sand.u32 %s63, 1
          %s388 = smul.addr %s387, 32
          %s389 = scalar_lea.vmem [#allocation3], %s388
          %s391 = ssub.s32 512, 512
          %392 = vsyncadd %s386, %s391
          %s393 = smul.addr %s32, 4
          %s394 = smul.addr %s393, 128
          %s395 = scalar_lea.hbm %s1, %s394
          %s396 = sshll.u32 %s389, 4
          %s397 = int_to_ptr.vmem [resolvable:$true] %s396
          %402 = dma.hbm_to_vmem [thread:$0]  %s395, 512, %s397, %s386, 128, 128, 8
        $region24: #{_subnetwork_step.1} parent=19 // pred_fallthru
          _
        // Predicated region
        $region25: #{_subnetwork_step.1} parent=19 // pred_check
          %p403 = pneg %p99
        $region26: #{_subnetwork_step.1} parent=19 // pred_check_branch
          %405 = sbr.rel (%p403) target = $region28
        $region27: #{_subnetwork_step.1} parent=19 // pred_region
          %s406 = sand.u32 %s89, 1
          %s407 = scalar_lea.sflag [#allocation7], %s406
          %s408 = sand.u32 %s89, 1
          %s409 = smul.addr %s408, 32
          %s410 = scalar_lea.vmem [#allocation6], %s409
          %s412 = ssub.s32 512, 512
          %413 = vsyncadd %s407, %s412
          %s414 = smul.addr %s32, 4
          %s415 = smul.addr %s414, 128
          %s416 = scalar_lea.hbm %s2, %s415
          %s417 = sshll.u32 %s410, 4
          %s418 = int_to_ptr.vmem [resolvable:$true] %s417
          %423 = dma.hbm_to_vmem [thread:$0]  %s416, 512, %s418, %s407, 128, 128, 8
        $region28: #{_subnetwork_step.1} parent=19 // pred_fallthru
          _
        // Predicated region
        $region29: #{_subnetwork_step.1} parent=19 // pred_check
          %p424 = pneg %p125
        $region30: #{_subnetwork_step.1} parent=19 // pred_check_branch
          %426 = sbr.rel (%p424) target = $region32
        $region31: #{_subnetwork_step.1} parent=19 // pred_region
          %p427 = scmp.lt.s32.totalorder %s32, 2
          %s428 = scalar_select %p427, %s32, 2
          %s429 = scalar_lea.vmem %s3, %s428
        $region32: #{_subnetwork_step.1} parent=19 // pred_fallthru
          _
        // Predicated region
        $region33: #{_subnetwork_step.1} parent=19 // pred_check
          %p430 = pneg %p151
        $region34: #{_subnetwork_step.1} parent=19 // pred_check_branch
          %432 = sbr.rel (%p430) target = $region36
        $region35: #{_subnetwork_step.1} parent=19 // pred_region
          %p433 = scmp.lt.s32.totalorder %s32, 2
          %s434 = scalar_select %p433, %s32, 2
          %s435 = smul.addr %s434, 4
          %s436 = smul.addr %s435, 8
          %s437 = scalar_lea.vmem %s4, %s436
        $region36: #{_subnetwork_step.1} parent=19 // pred_fallthru
          _
        // Predicated region
        $region37: #{_subnetwork_step.1} parent=19 // pred_check
          %p438 = pneg %p177
        $region38: #{_subnetwork_step.1} parent=19 // pred_check_branch
          %440 = sbr.rel (%p438) target = $region40
        $region39: #{_subnetwork_step.1} parent=19 // pred_region
          %p441 = scmp.lt.s32.totalorder %s32, 2
          %s442 = scalar_select %p441, %s32, 2
          %s443 = scalar_lea.vmem %s5, %s442
        $region40: #{_subnetwork_step.1} parent=19 // pred_fallthru
          _
        // Predicated region
        $region41: #{_subnetwork_step.1} parent=19 // pred_check
          %p444 = pneg %p203
        $region42: #{_subnetwork_step.1} parent=19 // pred_check_branch
          %446 = sbr.rel (%p444) target = $region44
        $region43: #{_subnetwork_step.1} parent=19 // pred_region
          %p447 = scmp.lt.s32.totalorder %s32, 2
          %s448 = scalar_select %p447, %s32, 2
          %s449 = scalar_lea.vmem %s6, %s448
        $region44: #{_subnetwork_step.1} parent=19 // pred_fallthru
          _
        // Predicated region
        $region45: #{_subnetwork_step.1} parent=19 // pred_check
          %p450 = pneg %p229
        $region46: #{_subnetwork_step.1} parent=19 // pred_check_branch
          %452 = sbr.rel (%p450) target = $region48
        $region47: #{_subnetwork_step.1} parent=19 // pred_region
          %p453 = scmp.lt.s32.totalorder %s32, 2
          %s454 = scalar_select %p453, %s32, 2
          %s455 = scalar_lea.vmem %s7, %s454
        $region48: #{_subnetwork_step.1} parent=19 // pred_fallthru
          _
        // Predicated region
        $region49: #{_subnetwork_step.1} parent=19 // pred_check
          %p456 = pneg %p255
        $region50: #{_subnetwork_step.1} parent=19 // pred_check_branch
          %458 = sbr.rel (%p456) target = $region52
        $region51: #{_subnetwork_step.1} parent=19 // pred_region
          %p459 = scmp.lt.s32.totalorder %s32, 2
          %s460 = scalar_select %p459, %s32, 2
          %s461 = scalar_lea.vmem %s8, %s460
        $region52: #{_subnetwork_step.1} parent=19 // pred_fallthru
          _
      $region20: #{_subnetwork_step.1} parent=5 // pred_fallthru
        _
      %p462 = scmp.le.s32.totalorder 1, %s32
      %p463 = scmp.lt.s32.totalorder %s32, 4
      %p464 = pnand %p462, %p463
      %p465 = pneg %p464
      // Predicated region
      $region53: #{_subnetwork_step.1} parent=5 // pred_check
        _
      $region54: #{_subnetwork_step.1} parent=5 // pred_check_branch
        %467 = sbr.rel (%p464) target = $region56
      $region55: #{_subnetwork_step.1} parent=5 // pred_region
        %s468 = ssub.s32 %s32, 1
        %s469 = sand.u32 %s66, 1
        %s470 = scalar_lea.sflag [#allocation4], %s469
        %s471 = sand.u32 %s66, 1
        %s472 = smul.addr %s471, 32
        %s473 = scalar_lea.vmem [#allocation3], %s472
        // Predicated region
        $region57: #{_subnetwork_step.1} parent=55 // pred_check
          %p474 = pneg %p79
        $region58: #{_subnetwork_step.1} parent=55 // pred_check_branch
          %476 = sbr.rel (%p474) target = $region60
        $region59: #{_subnetwork_step.1} parent=55 // pred_region
          %477 = dma.done %s470, 512
        $region60: #{_subnetwork_step.1} parent=55 // pred_fallthru
          _
        %s478 = sand.u32 %s92, 1
        %s479 = scalar_lea.sflag [#allocation7], %s478
        %s480 = sand.u32 %s92, 1
        %s481 = smul.addr %s480, 32
        %s482 = scalar_lea.vmem [#allocation6], %s481
        // Predicated region
        $region61: #{_subnetwork_step.1} parent=55 // pred_check
          %p483 = pneg %p105
        $region62: #{_subnetwork_step.1} parent=55 // pred_check_branch
          %485 = sbr.rel (%p483) target = $region64
        $region63: #{_subnetwork_step.1} parent=55 // pred_region
          %486 = dma.done %s479, 512
        $region64: #{_subnetwork_step.1} parent=55 // pred_fallthru
          _
        %p487 = pneg %p53
        %p488 = pneg %p50
        %s489 = sand.u32 %s66, 1
        %s490 = scalar_lea.sflag [#allocation4], %s489
        %s491 = sand.u32 %s66, 1
        %s492 = smul.addr %s491, 32
        %s493 = scalar_lea.vmem [#allocation3], %s492
        %p494 = pneg %p79
        %p495 = pneg %p76
        %s496 = sand.u32 %s92, 1
        %s497 = scalar_lea.sflag [#allocation7], %s496
        %s498 = sand.u32 %s92, 1
        %s499 = smul.addr %s498, 32
        %s500 = scalar_lea.vmem [#allocation6], %s499
        %p501 = pneg %p105
        %p502 = pneg %p102
        %p503 = scmp.lt.s32.totalorder %s37, 2
        %s504 = scalar_select %p503, %s37, 2
        %s505 = scalar_lea.vmem %s3, %s504
        %p506 = pneg %p131
        %p507 = pneg %p128
        %p508 = scmp.lt.s32.totalorder %s37, 2
        %s509 = scalar_select %p508, %s37, 2
        %s510 = smul.addr %s509, 4
        %s511 = smul.addr %s510, 8
        %s512 = scalar_lea.vmem %s4, %s511
        %p513 = pneg %p157
        %p514 = pneg %p154
        %p515 = scmp.lt.s32.totalorder %s37, 2
        %s516 = scalar_select %p515, %s37, 2
        %s517 = scalar_lea.vmem %s5, %s516
        %p518 = pneg %p183
        %p519 = pneg %p180
        %p520 = scmp.lt.s32.totalorder %s37, 2
        %s521 = scalar_select %p520, %s37, 2
        %s522 = scalar_lea.vmem %s6, %s521
        %p523 = pneg %p209
        %p524 = pneg %p206
        %p525 = scmp.lt.s32.totalorder %s37, 2
        %s526 = scalar_select %p525, %s37, 2
        %s527 = scalar_lea.vmem %s7, %s526
        %p528 = pneg %p235
        %p529 = pneg %p232
        %p530 = scmp.lt.s32.totalorder %s37, 2
        %s531 = scalar_select %p530, %s37, 2
        %s532 = scalar_lea.vmem %s8, %s531
        %p533 = pneg %p261
        %p534 = pneg %p258
        %p535 = pneg %p282
        %p536 = pneg %p279
        %p537 = pneg %p308
        %p538 = pneg %p305
        %s539 = sand.u32 %s37, 1
        %s540 = scalar_lea.sflag [#allocation10], %s539
        %s541 = sand.u32 %s295, 1
        %s542 = smul.addr %s541, 2
        %s543 = scalar_lea.vmem [#allocation9], %s542
        %p544 = pneg %p334
        %p545 = pneg %p331
        %s546 = sand.u32 %s37, 1
        %s547 = scalar_lea.sflag [#allocation10], %s546
        %s548 = sand.u32 %s321, 1
        %s549 = smul.addr %s548, 32
        %s550 = scalar_lea.vmem [#allocation11], %s549
        %p551 = pneg %p360
        %p552 = pneg %p357
        %s553 = sand.u32 %s347, 1
        %s554 = scalar_lea.sflag [#allocation13], %s553
        %s555 = sand.u32 %s347, 1
        %s556 = smul.addr %s555, 32
        %s557 = scalar_lea.vmem [#allocation12], %s556
        %p558 = scmp.lt.s32.totalorder %s37, 2
        %s559 = scalar_select %p558, %s37, 2
        %s560 = scalar_lea.vmem %s3, %s559
        %p561 = scmp.lt.s32.totalorder %s37, 2
        %s562 = scalar_select %p561, %s37, 2
        %s563 = smul.addr %s562, 4
        %s564 = smul.addr %s563, 8
        %s565 = scalar_lea.vmem %s4, %s564
        %p566 = scmp.lt.s32.totalorder %s37, 2
        %s567 = scalar_select %p566, %s37, 2
        %s568 = scalar_lea.vmem %s5, %s567
        %p569 = scmp.lt.s32.totalorder %s37, 2
        %s570 = scalar_select %p569, %s37, 2
        %s571 = scalar_lea.vmem %s6, %s570
        %p572 = scmp.lt.s32.totalorder %s37, 2
        %s573 = scalar_select %p572, %s37, 2
        %s574 = scalar_lea.vmem %s7, %s573
        %p575 = scmp.lt.s32.totalorder %s37, 2
        %s576 = scalar_select %p575, %s37, 2
        %s577 = scalar_lea.vmem %s8, %s576
        %p579 = scmp.eq.s32.totalorder %s37, 0
        // Predicated region
        $region65: #{_subnetwork_step.1} parent=55 // pred_check
          %p580 = pneg %p579
        $region66: #{_subnetwork_step.1} parent=55 // pred_check_branch
          %582 = sbr.rel (%p580) target = $region68
        $region67: #{_subnetwork_step.1} parent=55 // pred_region
          %v583 = vld [vmem:[%s0] sm:$0x3]
          %vm584 = vcmask 254976
          %585 = vst.msk [vmem:[#allocation2] sm:$0x3] %vm584, %v583
        $region68: #{_subnetwork_step.1} parent=55 // pred_fallthru
          _
        %v586 = vld [vmem:[#allocation2] sm:$0x3]
        %v587 = vld [vmem:[%s473] sm:$0xff]
        %v588 = vld [vmem:[%s473 + $0x8] sm:$0xff]
        %v589 = vld [vmem:[%s473 + $0x10] sm:$0xff]
        %v590 = vld [vmem:[%s473 + $0x18] sm:$0xff]
        %v591 = vld [vmem:[%s482] sm:$0xff]
        %v592 = vld [vmem:[%s482 + $0x8] sm:$0xff]
        %v593 = vld [vmem:[%s482 + $0x10] sm:$0xff]
        %v594 = vld [vmem:[%s482 + $0x18] sm:$0xff]
        %v595 = vld [vmem:[%s560] sm:$0x1]
        %v596 = vld [vmem:[%s565] sm:$0xff]
        %v597 = vld [vmem:[%s565 + $0x8] sm:$0xff]
        %v598 = vld [vmem:[%s565 + $0x10] sm:$0xff]
        %v599 = vld [vmem:[%s565 + $0x18] sm:$0xff]
        %v600 = vsub.f32 1.0, %v596
        %v601 = vsub.f32 1.0, %v597
        %v602 = vsub.f32 1.0, %v598
        %v603 = vsub.f32 1.0, %v599
        %v604 = vpack.c.bf16 %v586, %v586
        %v605 = vpack.c.bf16 %v588, %v587
        %v606 = vpack.c.bf16 %v590, %v589
        %vm607 = vcmask 261120
        %v609 = vsel %vm607, %v604, 0
        %611 = vmatprep.subr.bf16.mxu0 0
        %612 = vmatpush1.bf16.msra.mxu0 %v605
        %613 = vmatprep.subr.bf16.mxu0 0
        %614 = vmatpush1.bf16.msra.mxu0 %v606
        %615 = vmatprep.subr.bf16.mxu0 0
        %616 = vmatpush1.bf16.msra.mxu0 0
        %617 = vmatprep.subr.bf16.mxu0 0
        %618 = vmatpush1.bf16.msra.mxu0 0
        %619 = vmatprep.subr.bf16.mxu0 0
        %620 = vmatpush1.bf16.msra.mxu0 0
        %621 = vmatprep.subr.bf16.mxu0 0
        %622 = vmatpush1.bf16.msra.mxu0 0
        %623 = vmatprep.subr.bf16.mxu0 0
        %624 = vmatpush1.bf16.msra.mxu0 0
        %625 = vmatprep.subr.bf16.mxu0 0
        %626 = vmatpush1.bf16.msra.mxu0 0
        %627 = vmatprep.subr.bf16.mxu0 0
        %628 = vmatpush1.bf16.msra.mxu0 0
        %629 = vmatprep.subr.bf16.mxu0 0
        %630 = vmatpush1.bf16.msra.mxu0 0
        %631 = vmatprep.subr.bf16.mxu0 0
        %632 = vmatpush1.bf16.msra.mxu0 0
        %633 = vmatprep.subr.bf16.mxu0 0
        %634 = vmatpush1.bf16.msra.mxu0 0
        %635 = vmatprep.subr.bf16.mxu0 0
        %636 = vmatpush1.bf16.msra.mxu0 0
        %637 = vmatprep.subr.bf16.mxu0 0
        %638 = vmatpush1.bf16.msra.mxu0 0
        %639 = vmatprep.subr.bf16.mxu0 0
        %640 = vmatpush1.bf16.msra.mxu0 0
        %641 = vmatprep.subr.bf16.mxu0 0
        %642 = vmatpush1.bf16.msra.mxu0 0
        %643 = vmatprep.mubr.bf16.mxu0 0
        %644 = vmatmul.mubr.bf16.gmra.mrb[0].mxu0 %v609
        %v645 = vpop.f32.mrb[0].mxu0
        %v646 = vadd.f32 0.0, %v645
        %v647 = vpop.f32.mrb[0].mxu0
        %v648 = vpop.f32.mrb[0].mxu0
        %v649 = vpop.f32.mrb[0].mxu0
        %650 = vdwg.mxu0
        %v651 = vld [vmem:[%s571] sm:$0x1]
        %653 = vset.pattern.permute.xlu0 0
        %654 = vperm.xlu0 %653, %v600
        %v655 = vpop.permute.xlu0 %654
        %658 = vset.pattern.permute.xlu0 0
        %659 = vperm.xlu0 %658, %v601
        %v660 = vpop.permute.xlu0 %659
        %663 = vset.pattern.permute.xlu0 0
        %664 = vperm.xlu0 %663, %v602
        %v665 = vpop.permute.xlu0 %664
        %668 = vset.pattern.permute.xlu0 0
        %669 = vperm.xlu0 %668, %v603
        %v670 = vpop.permute.xlu0 %669
        %v672 = vmul.f32 %v591, %v655
        %v673 = vmul.f32 %v592, %v660
        %v674 = vmul.f32 %v593, %v665
        %v675 = vmul.f32 %v594, %v670
        %v677 = vlaneseq
        %v678 = vshrl.u32 %v677, 7
        %v679 = vsub.s32 0, %v678
        %v680 = vrot.slane %v651, %v679
        %v682 = vadd.f32 %v646, %v680
        %v683 = vmax.f32 %v682, 0.0
        %v684 = vld [vmem:[%s574] sm:$0x1]
        %v685 = vld [vmem:[%s577] sm:$0x1]
        %vm686 = vcmask 254976
        %v687 = vsel %vm686, %v683, 0.0
        %688 = vadd.xlane.f32.xlu0 %v687
        %v689 = vpop.xlane.xlu0 %688
        %v690 = vrcp.pop 32.0
        %v691 = vmul.f32 %v689, %v690
        %v692 = vmul.f32 %v683, %v683
        %v693 = vsel %vm686, %v692, 0.0
        %694 = vadd.xlane.f32.xlu0 %v693
        %v695 = vpop.xlane.xlu0 %694
        %v696 = vmul.f32 %v695, %v690
        %v697 = vmul.f32 %v691, %v691
        %v698 = vsub.f32 %v696, %v697
        %v699 = vmax.f32 %v698, 0.0
        %v700 = vsub.f32 %v683, %v691
        %v701 = vadd.f32 %v699, 1e-05
        %v702 = vrsqrt.pop %v701
        %v703 = vmul.f32 %v700, %v702
        %v705 = vlaneseq
        %v706 = vshrl.u32 %v705, 7
        %v707 = vsub.s32 0, %v706
        %v708 = vrot.slane %v684, %v707
        %v710 = vmul.f32 %v703, %v708
        %v712 = vlaneseq
        %v713 = vshrl.u32 %v712, 7
        %v714 = vsub.s32 0, %v713
        %v715 = vrot.slane %v685, %v714
        %v717 = vadd.f32 %v710, %v715
        %718 = vst.msk [vmem:[#allocation2] sm:$0x3] %vm686, %v717
        %719 = vst.msk [vmem:[%s543] sm:$0x3] %vm686, %v717
        %720 = vst.msk [vmem:[#allocation8] sm:$0x3] %vm686, %v717
        %v722 = vlaneseq
        %v723 = vshrl.u32 %v722, 7
        %v724 = vsub.s32 0, %v723
        %v725 = vrot.slane %v595, %v724
        %v727 = vmul.f32 %v646, %v725
        %v728 = vpack.c.bf16 %v727, %v727
        %729 = vxpose.xlu0.c.b16.start [1/8] %v604, 128
        %730 = vxpose.xlu0.c.b16.cont [2/8] 0, 128
        %731 = vxpose.xlu0.c.b16.cont [3/8] 0, 128
        %732 = vxpose.xlu0.c.b16.cont [4/8] 0, 128
        %733 = vxpose.xlu0.c.b16.cont [5/8] 0, 128
        %734 = vxpose.xlu0.c.b16.cont [6/8] 0, 128
        %735 = vxpose.xlu0.c.b16.cont [7/8] 0, 128
        %736 = vxpose.xlu0.c.b16.end [8/8] 0, 128
        %v737 = vpop.trf.xlu0
        %v738 = vpop.trf.xlu0
        %v739 = vpop.trf.xlu0
        %v740 = vpop.trf.xlu0
        %v741 = vpop.trf.xlu0
        %v742 = vpop.trf.xlu0
        %v743 = vpop.trf.xlu0
        %v744 = vpop.trf.xlu0
        %vm745 = vcmask 15360
        %v747 = vsel %vm745, %v737, 0
        %v750 = vsel %vm745, %v738, 0
        %vm752 = vcmask 1040384
        %v754 = vsel %vm752, %v728, 0
        %756 = vmatprep.subr.bf16.mxu0 0
        %757 = vmatpush1.bf16.msra.mxu0 %v754
        %758 = vmatprep.subr.bf16.mxu0 0
        %759 = vmatpush1.bf16.msra.mxu0 0
        %760 = vmatprep.subr.bf16.mxu0 0
        %761 = vmatpush1.bf16.msra.mxu0 0
        %762 = vmatprep.subr.bf16.mxu0 0
        %763 = vmatpush1.bf16.msra.mxu0 0
        %764 = vmatprep.subr.bf16.mxu0 0
        %765 = vmatpush1.bf16.msra.mxu0 0
        %766 = vmatprep.subr.bf16.mxu0 0
        %767 = vmatpush1.bf16.msra.mxu0 0
        %768 = vmatprep.subr.bf16.mxu0 0
        %769 = vmatpush1.bf16.msra.mxu0 0
        %770 = vmatprep.subr.bf16.mxu0 0
        %771 = vmatpush1.bf16.msra.mxu0 0
        %772 = vmatprep.subr.bf16.mxu0 0
        %773 = vmatpush1.bf16.msra.mxu0 0
        %774 = vmatprep.subr.bf16.mxu0 0
        %775 = vmatpush1.bf16.msra.mxu0 0
        %776 = vmatprep.subr.bf16.mxu0 0
        %777 = vmatpush1.bf16.msra.mxu0 0
        %778 = vmatprep.subr.bf16.mxu0 0
        %779 = vmatpush1.bf16.msra.mxu0 0
        %780 = vmatprep.subr.bf16.mxu0 0
        %781 = vmatpush1.bf16.msra.mxu0 0
        %782 = vmatprep.subr.bf16.mxu0 0
        %783 = vmatpush1.bf16.msra.mxu0 0
        %784 = vmatprep.subr.bf16.mxu0 0
        %785 = vmatpush1.bf16.msra.mxu0 0
        %786 = vmatprep.subr.bf16.mxu0 0
        %787 = vmatpush1.bf16.msra.mxu0 0
        %788 = vmatprep.mubr.bf16.mxu0 0
        %789 = vmatmul.mubr.bf16.gmra.mrb[0].mxu0 %v747
        %v790 = vpop.f32.mrb[0].mxu0
        %v791 = vadd.f32 0.0, %v790
        %v792 = vpop.f32.mrb[0].mxu0
        %v793 = vpop.f32.mrb[0].mxu0
        %v794 = vadd.f32 0.0, %v793
        %v795 = vpop.f32.mrb[0].mxu0
        %796 = vmatprep.mubr.bf16.mxu0 0
        %797 = vmatmul.mubr.bf16.gmra.mrb[0].mxu0 %v750
        %v798 = vpop.f32.mrb[0].mxu0
        %v799 = vadd.f32 0.0, %v798
        %v800 = vpop.f32.mrb[0].mxu0
        %v801 = vpop.f32.mrb[0].mxu0
        %v802 = vadd.f32 0.0, %v801
        %v803 = vpop.f32.mrb[0].mxu0
        %804 = vdwg.mxu0
        %v805 = vmul.f32 %v587, %v655
        %v806 = vmul.f32 %v588, %v660
        %v807 = vmul.f32 %v589, %v665
        %v808 = vmul.f32 %v590, %v670
        %v809 = vadd.f32 %v805, %v791
        %v810 = vadd.f32 %v806, %v794
        %v811 = vadd.f32 %v807, %v799
        %v812 = vadd.f32 %v808, %v802
        %v813 = vmul.f32 %v809, %v809
        %v814 = vmul.f32 %v810, %v810
        %v815 = vmul.f32 %v811, %v811
        %v816 = vmul.f32 %v812, %v812
        %v817 = vsel %vm607, %v813, 0.0
        %818 = vadd.xlane.f32.xlu0 %v817
        %v819 = vpop.xlane.xlu0 %818
        %v820 = vsel %vm607, %v814, 0.0
        %821 = vadd.xlane.f32.xlu0 %v820
        %v822 = vpop.xlane.xlu0 %821
        %v823 = vsel %vm607, %v815, 0.0
        %824 = vadd.xlane.f32.xlu0 %v823
        %v825 = vpop.xlane.xlu0 %824
        %v826 = vsel %vm607, %v816, 0.0
        %827 = vadd.xlane.f32.xlu0 %v826
        %v828 = vpop.xlane.xlu0 %827
        %v829 = vmax.f32 %v819, 1e-24
        %v830 = vmax.f32 %v822, 1e-24
        %v831 = vmax.f32 %v825, 1e-24
        %v832 = vmax.f32 %v828, 1e-24
        %v833 = vrsqrt.pop %v829
        %v834 = vrsqrt.pop %v830
        %v835 = vrsqrt.pop %v831
        %v836 = vrsqrt.pop %v832
        %v837 = vmul.f32 %v809, %v833
        %v838 = vmul.f32 %v810, %v834
        %v839 = vmul.f32 %v811, %v835
        %v840 = vmul.f32 %v812, %v836
        %841 = vst.msk [vmem:[%s550] sm:$0xff] %vm607, %v837
        %842 = vst.msk [vmem:[%s550 + $0x8] sm:$0xff] %vm607, %v838
        %843 = vst.msk [vmem:[%s550 + $0x10] sm:$0xff] %vm607, %v839
        %844 = vst.msk [vmem:[%s550 + $0x18] sm:$0xff] %vm607, %v840
        %v845 = vmul.f32 %v672, %v672
        %v846 = vmul.f32 %v673, %v673
        %v847 = vmul.f32 %v674, %v674
        %v848 = vmul.f32 %v675, %v675
        %v849 = vsel %vm607, %v845, 0.0
        %850 = vadd.xlane.f32.xlu0 %v849
        %v851 = vpop.xlane.xlu0 %850
        %v852 = vsel %vm607, %v846, 0.0
        %853 = vadd.xlane.f32.xlu0 %v852
        %v854 = vpop.xlane.xlu0 %853
        %v855 = vsel %vm607, %v847, 0.0
        %856 = vadd.xlane.f32.xlu0 %v855
        %v857 = vpop.xlane.xlu0 %856
        %v858 = vsel %vm607, %v848, 0.0
        %859 = vadd.xlane.f32.xlu0 %v858
        %v860 = vpop.xlane.xlu0 %859
        %v861 = vmax.f32 %v851, 1e-24
        %v862 = vmax.f32 %v854, 1e-24
        %v863 = vmax.f32 %v857, 1e-24
        %v864 = vmax.f32 %v860, 1e-24
        %v865 = vrsqrt.pop %v861
        %v866 = vrsqrt.pop %v862
        %v867 = vrsqrt.pop %v863
        %v868 = vrsqrt.pop %v864
        %v869 = vmul.f32 %v672, %v865
        %v870 = vmul.f32 %v673, %v866
        %v871 = vmul.f32 %v674, %v867
        %v872 = vmul.f32 %v675, %v868
        %873 = vst.msk [vmem:[%s557] sm:$0xff] %vm607, %v869
        %874 = vst.msk [vmem:[%s557 + $0x8] sm:$0xff] %vm607, %v870
        %875 = vst.msk [vmem:[%s557 + $0x10] sm:$0xff] %vm607, %v871
        %876 = vst.msk [vmem:[%s557 + $0x18] sm:$0xff] %vm607, %v872
        %s877 = sand.u32 %s37, 1
        %s878 = scalar_lea.sflag [#allocation10], %s877
        %s879 = sand.u32 %s295, 1
        %s880 = smul.addr %s879, 2
        %s881 = scalar_lea.vmem [#allocation9], %s880
        %s882 = sand.u32 %s37, 1
        %s883 = scalar_lea.sflag [#allocation10], %s882
        %s884 = sand.u32 %s321, 1
        %s885 = smul.addr %s884, 32
        %s886 = scalar_lea.vmem [#allocation11], %s885
        %s887 = sand.u32 %s347, 1
        %s888 = scalar_lea.sflag [#allocation13], %s887
        %s889 = sand.u32 %s347, 1
        %s890 = smul.addr %s889, 32
        %s891 = scalar_lea.vmem [#allocation12], %s890
        // Predicated region
        $region69: #{_subnetwork_step.1} parent=55 // pred_check
          %p892 = pneg %p279
        $region70: #{_subnetwork_step.1} parent=55 // pred_check_branch
          %894 = sbr.rel (%p892) target = $region72
        $region71: #{_subnetwork_step.1} parent=55 // pred_region
          %s896 = ssub.s32 32, 32
          %897 = vsyncadd [#allocation5], %s896
          %s899 = sshll.u32 [#allocation8], 4
          %s900 = int_to_ptr.vmem [resolvable:$true] %s899
          %902 = dma.vmem_to_hbm [thread:$0]  %s900, 32, %s9, [#allocation5]
        $region72: #{_subnetwork_step.1} parent=55 // pred_fallthru
          _
        // Predicated region
        $region73: #{_subnetwork_step.1} parent=55 // pred_check
          %p903 = pneg %p305
        $region74: #{_subnetwork_step.1} parent=55 // pred_check_branch
          %905 = sbr.rel (%p903) target = $region76
        $region75: #{_subnetwork_step.1} parent=55 // pred_region
          %s907 = ssub.s32 32, 32
          %908 = vsyncadd %s878, %s907
          %s909 = smul.addr %s37, 32
          %s910 = scalar_lea.hbm %s10, %s909
          %s912 = sshll.u32 %s881, 4
          %s913 = int_to_ptr.vmem [resolvable:$true] %s912
          %915 = dma.vmem_to_hbm [thread:$0]  %s913, 32, %s910, %s878
        $region76: #{_subnetwork_step.1} parent=55 // pred_fallthru
          _
        // Predicated region
        $region77: #{_subnetwork_step.1} parent=55 // pred_check
          %p916 = pneg %p331
        $region78: #{_subnetwork_step.1} parent=55 // pred_check_branch
          %918 = sbr.rel (%p916) target = $region80
        $region79: #{_subnetwork_step.1} parent=55 // pred_region
          %s920 = ssub.s32 512, 512
          %921 = vsyncadd %s883, %s920
          %s922 = smul.addr %s37, 4
          %s923 = smul.addr %s922, 128
          %s924 = scalar_lea.hbm %s11, %s923
          %s925 = sshll.u32 %s886, 4
          %s926 = int_to_ptr.vmem [resolvable:$true] %s925
          %931 = dma.vmem_to_hbm [thread:$0]  %s926, 512, %s924, %s883, 128, 128, 8
        $region80: #{_subnetwork_step.1} parent=55 // pred_fallthru
          _
        // Predicated region
        $region81: #{_subnetwork_step.1} parent=55 // pred_check
          %p932 = pneg %p357
        $region82: #{_subnetwork_step.1} parent=55 // pred_check_branch
          %934 = sbr.rel (%p932) target = $region84
        $region83: #{_subnetwork_step.1} parent=55 // pred_region
          %s936 = ssub.s32 512, 512
          %937 = vsyncadd %s888, %s936
          %s938 = smul.addr %s37, 4
          %s939 = smul.addr %s938, 128
          %s940 = scalar_lea.hbm %s12, %s939
          %s941 = sshll.u32 %s891, 4
          %s942 = int_to_ptr.vmem [resolvable:$true] %s941
          %947 = dma.vmem_to_hbm [thread:$0]  %s942, 512, %s940, %s888, 128, 128, 8
        $region84: #{_subnetwork_step.1} parent=55 // pred_fallthru
          _
        // Predicated region
        $region85: #{_subnetwork_step.1} parent=55 // pred_check
          %p948 = pneg %p279
        $region86: #{_subnetwork_step.1} parent=55 // pred_check_branch
          %950 = sbr.rel (%p948) target = $region88
        $region87: #{_subnetwork_step.1} parent=55 // pred_region
          %951 = dma.done [#allocation5], 32
        $region88: #{_subnetwork_step.1} parent=55 // pred_fallthru
          _
      $region56: #{_subnetwork_step.1} parent=5 // pred_fallthru
        _
      %p952 = scmp.le.s32.totalorder 2, %s32
      // Predicated region
      $region89: #{_subnetwork_step.1} parent=5 // pred_check
        %p953 = pneg %p952
      $region90: #{_subnetwork_step.1} parent=5 // pred_check_branch
        %955 = sbr.rel (%p953) target = $region92
      $region91: #{_subnetwork_step.1} parent=5 // pred_region
        %s956 = ssub.s32 %s32, 2
        // Predicated region
        $region93: #{_subnetwork_step.1} parent=91 // pred_check
          %p957 = pneg %p311
        $region94: #{_subnetwork_step.1} parent=91 // pred_check_branch
          %959 = sbr.rel (%p957) target = $region96
        $region95: #{_subnetwork_step.1} parent=91 // pred_region
          %s960 = sand.u32 %s38, 1
          %s961 = scalar_lea.sflag [#allocation10], %s960
          %s962 = sand.u32 %s296, 1
          %s963 = smul.addr %s962, 2
          %s964 = scalar_lea.vmem [#allocation9], %s963
          %965 = dma.done %s961, 32
        $region96: #{_subnetwork_step.1} parent=91 // pred_fallthru
          _
        // Predicated region
        $region97: #{_subnetwork_step.1} parent=91 // pred_check
          %p966 = pneg %p337
        $region98: #{_subnetwork_step.1} parent=91 // pred_check_branch
          %968 = sbr.rel (%p966) target = $region100
        $region99: #{_subnetwork_step.1} parent=91 // pred_region
          %s969 = sand.u32 %s38, 1
          %s970 = scalar_lea.sflag [#allocation10], %s969
          %s971 = sand.u32 %s322, 1
          %s972 = smul.addr %s971, 32
          %s973 = scalar_lea.vmem [#allocation11], %s972
          %974 = dma.done %s970, 512
        $region100: #{_subnetwork_step.1} parent=91 // pred_fallthru
          _
        // Predicated region
        $region101: #{_subnetwork_step.1} parent=91 // pred_check
          %p975 = pneg %p363
        $region102: #{_subnetwork_step.1} parent=91 // pred_check_branch
          %977 = sbr.rel (%p975) target = $region104
        $region103: #{_subnetwork_step.1} parent=91 // pred_region
          %s978 = sand.u32 %s348, 1
          %s979 = scalar_lea.sflag [#allocation13], %s978
          %s980 = sand.u32 %s348, 1
          %s981 = smul.addr %s980, 32
          %s982 = scalar_lea.vmem [#allocation12], %s981
          %983 = dma.done %s979, 512
        $region104: #{_subnetwork_step.1} parent=91 // pred_fallthru
          _
      $region92: #{_subnetwork_step.1} parent=5 // pred_fallthru
        _
    $region6: #{_subnetwork_step.1} parent=1 // loop_footer
      %s36 = sadd.s32 1, %s32
    $region7: #{_subnetwork_step.1} parent=1 // loop_footer_branch
      %31 = sbr.rel target = $region3
    $region8: #{_subnetwork_step.1} parent=1 // loop_exit
      _
    %984 = vsyncpa [#allocation4], 1
    %s985 = scalar_lea.sflag [#allocation4], 1
    %986 = vsyncpa %s985, 1
    %987 = vsyncpa [#allocation7], 1
    %s988 = scalar_lea.sflag [#allocation7], 1
    %989 = vsyncpa %s988, 1
    %990 = vsyncpa [#allocation5], 1
    %s991 = scalar_lea.sflag [#allocation5], 1
    %992 = vsyncpa %s991, 1
    %993 = vsyncpa [#allocation10], 1
    %s994 = scalar_lea.sflag [#allocation10], 1
    %995 = vsyncpa %s994, 1
    %996 = vsyncpa [#allocation13], 1
    %s997 = scalar_lea.sflag [#allocation13], 1
    %998 = vsyncpa %s997, 1

</llo_original>
